<compile_context>
chip_gen: v7x
topology: tpu7x:2x2x1
jax: 0.10.0
libtpu: 0.0.40
codegen_flags: <defaults>
</compile_context>

<pallas_src>
import jax
import jax.numpy as jnp
from jax.experimental import pallas as pl
from jax.experimental.pallas import tpu as pltpu


def _make_kernel(K, L, NBL, has_sc, mm_dtype, C_in_pad, C_out_pad):
    pad = K // 2

    def kernel(*refs):
        if has_sc:
            x_ref, w1_ref, w2_ref, wsc_ref, c_ref, out_ref = refs
        else:
            x_ref, w1_ref, w2_ref, c_ref, out_ref = refs

        c = c_ref[...]                                   # (C_out_pad, 8) consts
        t1, a, t2, tsc = c[:, 0:1], c[:, 1:2], c[:, 2:3], c[:, 3:4]

        x = x_ref[...]                                   # (C_in_pad, NBL) f32
        xm = x if mm_dtype == x.dtype else x.astype(mm_dtype)

        # Hoisted lane-position tensors: lane p belongs to sequence position
        # p % L (batch is folded into the lane axis); reused by every conv tap.
        pos_in = jax.lax.broadcasted_iota(jnp.int32, (C_in_pad, NBL), 1) % L
        pos_out = (pos_in if C_out_pad == C_in_pad else
                   jax.lax.broadcasted_iota(jnp.int32, (C_out_pad, NBL), 1) % L)

        def im2col(v, pos):
            # (C, NBL) -> (K*C, NBL).  Row block k holds v[:, p + (k - pad)]
            # (lane roll on the XLU), zeroed where the tap would cross a
            # sequence (= batch) boundary -> reproduces Conv1d zero padding.
            parts = []
            for k in range(K):
                d = k - pad
                if d == 0:
                    parts.append(v)
                    continue
                r = pltpu.roll(v, shift=(-d) % NBL, axis=1)   # r[:, p] = v[:, p+d]
                valid = (pos + d >= 0) & (pos + d < L)
                parts.append(jnp.where(valid, r, jnp.zeros_like(r)))
            return parts[0] if K == 1 else jnp.concatenate(parts, axis=0)

        # conv1[0] (BN1 scale pre-folded into w1) + shift, then PReLU (shared a).
        h = jnp.dot(w1_ref[...], im2col(xm, pos_in),
                    preferred_element_type=jnp.float32) + t1
        h = jnp.where(h >= 0.0, h, a * h)

        # conv1[3] (BN2 scale pre-folded into w2) + shift; intermediate stays in
        # vregs, its masked halo == this conv's zero padding.
        hm = h if mm_dtype == jnp.float32 else h.astype(mm_dtype)
        z = jnp.dot(w2_ref[...], im2col(hm, pos_out),
                    preferred_element_type=jnp.float32) + t2
        # TODO(synk): optional K-accumulating variant (acc += w2_k @ roll(h, d))
        #             to cut the im2col(h) footprint when VMEM-bound (v7x).

        if has_sc:
            ident = jnp.dot(wsc_ref[...], xm,
                            preferred_element_type=jnp.float32) + tsc
        else:
            ident = x                                    # exact f32 residual

        o = z + ident
        out_ref[...] = jnp.where(o >= 0.0, o, 0.01 * o).astype(out_ref.dtype)

    return kernel


def _pick_nb(N, L, bytes_per_col, budget_bytes, max_nb):
    """Batch elements per grid step: largest divisor of N that fits the VMEM
    budget, preferring 128-multiple (or full-extent) lane blocks and >=2 steps."""
    divs = [d for d in range(min(N, max_nb), 0, -1) if N % d == 0]

    def fits(nb):
        return nb * L * bytes_per_col <= budget_bytes

    for nb in divs:                                  # aligned AND >= 2 grid steps
        if fits(nb) and (((nb * L) % 128 == 0) or nb == N) and (N // nb >= 2):
            return nb
    for nb in divs:                                  # aligned only
        if fits(nb) and (((nb * L) % 128 == 0) or nb == N):
            return nb
    for nb in divs:                                  # anything that fits
        if fits(nb):
            return nb
    return 1


def resblock1d_prelu_forward(x, p, *, use_bf16_matmul=False, max_batch_per_step=8):
    """x: (N, C_in, L) float32, PyTorch NCL layout. Returns (N, C_out, L) f32."""
    N, C_in, L = x.shape
    C_out, _, K = p["w1"].shape
    if K % 2 != 1:
        # PyTorch Conv1d(padding=K//2) with even K yields L+1 outputs.
        raise NotImplementedError("even kernel_size is not supported")
    eps = 1e-5
    f32 = jnp.float32
    has_sc = (C_in != C_out)
    # TODO(synk): default use_bf16_matmul=True on v6e/v7x (keep f32 on v5e).
    mm_dtype = jnp.bfloat16 if use_bf16_matmul else f32
    SUB = 16 if use_bf16_matmul else 8               # sublane granularity
    C_in_pad = -(-C_in // SUB) * SUB
    C_out_pad = -(-C_out // SUB) * SUB

    def fold(bias, gamma, beta, mean, var):
        scale = (gamma / jnp.sqrt(var + eps)).astype(f32)
        shift = ((bias - mean) * scale + beta).astype(f32)
        return scale, shift

    s1, t1 = fold(p["b1"], p["g1"], p["be1"], p["m1"], p["v1"])
    s2, t2 = fold(p["b2"], p["g2"], p["be2"], p["m2"], p["v2"])
    a_vec = jnp.full((C_out,), p["prelu_a"], f32)
    if has_sc:
        ssc, tsc = fold(p["bsc"], p["gsc"], p["besc"], p["msc"], p["vsc"])
    else:
        tsc = jnp.zeros((C_out,), f32)

    def pad_rows(v):
        return jnp.pad(v, (0, C_out_pad - C_out))

    # Fused per-channel constants (one DMA): [t1, a, t2, tsc, 0, 0, 0, 0].
    consts = jnp.stack(
        [pad_rows(t1), pad_rows(a_vec), pad_rows(t2), pad_rows(tsc)]
        + [jnp.zeros((C_out_pad,), f32)] * 4, axis=1)            # (C_out_pad, 8)

    def pack_w(w, scale, cin, cin_pad):
        # w: (C_out, cin, K); BN scale folded into the weights here.
        w = (w * scale[:, None, None]).astype(f32)
        w = jnp.pad(w, ((0, C_out_pad - C_out), (0, cin_pad - cin), (0, 0)))
        # column index = k * cin_pad + c  (matches the in-kernel im2col rows)
        return jnp.transpose(w, (0, 2, 1)).reshape(C_out_pad, K * cin_pad) \
                  .astype(mm_dtype)

    w1_2d = pack_w(p["w1"], s1, C_in, C_in_pad)
    w2_2d = pack_w(p["w2"], s2, C_out, C_out_pad)

    # Channels-first, batch folded into the lane axis: x2d[c, n*L + l] = x[n,c,l].
    # x stays f32 (exact identity residual); matmul operands are cast in-kernel.
    x2d = jnp.transpose(x, (1, 0, 2)).reshape(C_in, N * L).astype(f32)
    if C_in_pad > C_in:
        x2d = jnp.pad(x2d, ((0, C_in_pad - C_in), (0, 0)))

    # VMEM budget per lane column: double-buffered x/out blocks + live im2col
    # slabs + h/z/ident/mask intermediates.
    mm_b = 2 if use_bf16_matmul else 4
    bytes_per_col = (2 * (C_in_pad + C_out_pad) * 4
                     + K * (C_in_pad + C_out_pad) * mm_b
                     + (2 * C_in_pad + 4 * C_out_pad) * 4)
    NB = _pick_nb(N, L, bytes_per_col, budget_bytes=14 << 20,
                  max_nb=max_batch_per_step)
    NBL = NB * L

    kernel = _make_kernel(K, L, NBL, has_sc, mm_dtype, C_in_pad, C_out_pad)

    in_specs = [
        pl.BlockSpec((C_in_pad, NBL), lambda n: (0, n)),          # x slab
        pl.BlockSpec((C_out_pad, K * C_in_pad), lambda n: (0, 0)),   # w1 (im2col)
        pl.BlockSpec((C_out_pad, K * C_out_pad), lambda n: (0, 0)),  # w2 (im2col)
    ]
    args = [x2d, w1_2d, w2_2d]
    if has_sc:
        wsc2d = jnp.pad(p["wsc"][:, :, 0] * ssc[:, None],
                        ((0, C_out_pad - C_out), (0, C_in_pad - C_in))) \
                   .astype(mm_dtype)
        in_specs.append(pl.BlockSpec((C_out_pad, C_in_pad), lambda n: (0, 0)))
        args.append(wsc2d)
    in_specs.append(pl.BlockSpec((C_out_pad, 8), lambda n: (0, 0)))  # consts
    args.append(consts)

    weight_bytes = sum(int(a.size) * a.dtype.itemsize for a in args[1:])
    est_bytes = bytes_per_col * NBL + 2 * weight_bytes
    vmem_limit = int(min(max(2 * est_bytes, 32 << 20), 56 << 20))

    flops = 2 * N * L * (C_out * K * C_in + C_out * K * C_out
                         + (C_out * C_in if has_sc else 0))
    bytes_acc = int(x2d.size) * 4 + weight_bytes + N * L * C_out_pad * 4

    out2d = pl.pallas_call(
        kernel,
        out_shape=jax.ShapeDtypeStruct((C_out_pad, N * L), f32),
        grid=(N // NB,),
        in_specs=in_specs,
        out_specs=pl.BlockSpec((C_out_pad, NBL), lambda n: (0, n)),
        compiler_params=pltpu.CompilerParams(
            dimension_semantics=("parallel",),       # batch groups independent
            vmem_limit_bytes=vmem_limit),
        cost_estimate=pl.CostEstimate(
            flops=int(flops), transcendentals=0, bytes_accessed=int(bytes_acc)),
    )(*args)

    # Lane-dense slab -> PyTorch NCL layout.
    return jnp.transpose(out2d[:C_out].reshape(C_out, N, L), (1, 0, 2))


def _ref_forward(x, p):
    """Pure-JAX reference (eval-mode BN), used only for the correctness check."""
    eps = 1e-5
    K = p["w1"].shape[2]
    pad = K // 2

    def conv1d(v, w, b, padding):
        y = jax.lax.conv_general_dilated(
            v, w, (1,), [(padding, padding)],
            dimension_numbers=("NCH", "OIH", "NCH"),
            precision=jax.lax.Precision.HIGHEST)
        return y + b[None, :, None]

    def bn(v, g, be, m, var):
        return (v - m[None, :, None]) / jnp.sqrt(var[None, :, None] + eps) \
            * g[None, :, None] + be[None, :, None]

    h = conv1d(x, p["w1"], p["b1"], pad)
    h = bn(h, p["g1"], p["be1"], p["m1"], p["v1"])
    h = jnp.where(h >= 0, h, p["prelu_a"] * h)
    h = conv1d(h, p["w2"], p["b2"], pad)
    h = bn(h, p["g2"], p["be2"], p["m2"], p["v2"])
    if x.shape[1] != p["w1"].shape[0]:
        ident = conv1d(x, p["wsc"], p["bsc"], 0)
        ident = bn(ident, p["gsc"], p["besc"], p["msc"], p["vsc"])
    else:
        ident = x
    o = h + ident
    return jnp.where(o >= 0, o, 0.01 * o)


def init_params(key, C_in, C_out, K):
    ks = jax.random.split(key, 18)
    nrm = lambda k, s, sc=0.1: jax.random.normal(k, s, jnp.float32) * sc
    uni = lambda k, s: jax.random.uniform(k, s, jnp.float32, 0.5, 1.5)
    return dict(
        # conv1[0] + BN
        w1=nrm(ks[0], (C_out, C_in, K), 0.2), b1=nrm(ks[1], (C_out,)),
        g1=uni(ks[2], (C_out,)), be1=nrm(ks[3], (C_out,)),
        m1=nrm(ks[4], (C_out,)), v1=uni(ks[5], (C_out,)),
        # PReLU default init
        prelu_a=jnp.float32(0.25),
        # conv1[3] + BN
        w2=nrm(ks[6], (C_out, C_out, K), 0.2), b2=nrm(ks[7], (C_out,)),
        g2=uni(ks[8], (C_out,)), be2=nrm(ks[9], (C_out,)),
        m2=nrm(ks[10], (C_out,)), v2=uni(ks[11], (C_out,)),
        # shortcut 1x1 conv + BN
        wsc=nrm(ks[12], (C_out, C_in, 1), 0.2), bsc=nrm(ks[13], (C_out,)),
        gsc=uni(ks[14], (C_out,)), besc=nrm(ks[15], (C_out,)),
        msc=nrm(ks[16], (C_out,)), vsc=uni(ks[17], (C_out,)),
    )


if __name__ == "__main__":
    key = jax.random.PRNGKey(0)
    kx, kp = jax.random.split(key)
    N, C_in, C_out, L, K = 2, 4, 8, 128, 3

    # Projection-shortcut branch (C_in != C_out).
    x = jax.random.normal(kx, (N, C_in, L), jnp.float32)
    params = init_params(kp, C_in, C_out, K)
    y = resblock1d_prelu_forward(x, params)
    jax.block_until_ready(y)
    assert y.shape == (N, C_out, L) and y.dtype == jnp.float32
    err = float(jnp.max(jnp.abs(y - _ref_forward(x, params))))
    assert err < 1e-3, f"mismatch vs reference: max abs err {err}"

    # Identity-shortcut branch (C_in == C_out).
    x2 = jax.random.normal(kx, (N, C_out, L), jnp.float32)
    p2 = init_params(kp, C_out, C_out, K)
    y2 = resblock1d_prelu_forward(x2, p2)
    jax.block_until_ready(y2)
    err2 = float(jnp.max(jnp.abs(y2 - _ref_forward(x2, p2))))
    assert err2 < 1e-3, f"identity-shortcut mismatch: max abs err {err2}"

    print("KERNEL_OK")
</pallas_src>

<mosaic_0001>
module attributes {stable_mosaic.version = 11 : i64} {
  func.func @kernel(%arg0: i32, %arg1: memref<8x128xf32, #tpu.memory_space<vmem>>, %arg2: memref<8x24xf32, #tpu.memory_space<vmem>>, %arg3: memref<8x24xf32, #tpu.memory_space<vmem>>, %arg4: memref<8x8xf32, #tpu.memory_space<vmem>>, %arg5: memref<8x8xf32, #tpu.memory_space<vmem>>, %arg6: memref<8x128xf32, #tpu.memory_space<vmem>>) attributes {dimension_semantics = [#tpu.dimension_semantics<parallel>], iteration_bounds = array<i64: 2>, scalar_prefetch = 0 : i64, scratch_operands = 0 : i64, tpu.core_type = #tpu.core_type<tc>, window_params = [{transform_indices = @transform_0, window_bounds = array<i64: 8, 128>}, {pipeline_mode = #tpu.pipeline_mode<synchronous>, transform_indices = @transform_1, window_bounds = array<i64: 8, 24>}, {pipeline_mode = #tpu.pipeline_mode<synchronous>, transform_indices = @transform_2, window_bounds = array<i64: 8, 24>}, {pipeline_mode = #tpu.pipeline_mode<synchronous>, transform_indices = @transform_3, window_bounds = array<i64: 8, 8>}, {pipeline_mode = #tpu.pipeline_mode<synchronous>, transform_indices = @transform_4, window_bounds = array<i64: 8, 8>}, {transform_indices = @transform_5, window_bounds = array<i64: 8, 128>}]} {
    %c0 = arith.constant 0 : index
    %c0_0 = arith.constant 0 : index
    %0 = vector.load %arg5[%c0, %c0_0] : memref<8x8xf32, #tpu.memory_space<vmem>>, vector<8x8xf32>
    %1 = vector.extract_strided_slice %0 {offsets = [0, 0], sizes = [8, 1], strides = [1, 1]} : vector<8x8xf32> to vector<8x1xf32>
    %2 = vector.extract_strided_slice %0 {offsets = [0, 1], sizes = [8, 1], strides = [1, 1]} : vector<8x8xf32> to vector<8x1xf32>
    %3 = vector.extract_strided_slice %0 {offsets = [0, 2], sizes = [8, 1], strides = [1, 1]} : vector<8x8xf32> to vector<8x1xf32>
    %4 = vector.extract_strided_slice %0 {offsets = [0, 3], sizes = [8, 1], strides = [1, 1]} : vector<8x8xf32> to vector<8x1xf32>
    %c0_1 = arith.constant 0 : index
    %c0_2 = arith.constant 0 : index
    %5 = vector.load %arg1[%c0_1, %c0_2] : memref<8x128xf32, #tpu.memory_space<vmem>>, vector<8x128xf32>
    %6 = tpu.iota {dimensions = array<i32: 1>} : vector<8x128xi32>
    %c128_i32 = arith.constant 128 : i32
    %c0_i32 = arith.constant 0 : i32
    %7 = arith.cmpi eq, %c128_i32, %c0_i32 : i32
    %c1_i32 = arith.constant 1 : i32
    %8 = arith.select %7, %c1_i32, %c128_i32 : i32
    %9 = vector.broadcast %8 : i32 to vector<8x128xi32>
    %10 = arith.remsi %6, %9 : vector<8x128xi32>
    %c0_i32_3 = arith.constant 0 : i32
    %11 = vector.broadcast %c0_i32_3 : i32 to vector<8x128xi32>
    %12 = arith.cmpi ne, %10, %11 : vector<8x128xi32>
    %c0_i32_4 = arith.constant 0 : i32
    %13 = vector.broadcast %c0_i32_4 : i32 to vector<8x128xi32>
    %14 = arith.cmpi slt, %10, %13 : vector<8x128xi32>
    %c0_i32_5 = arith.constant 0 : i32
    %15 = arith.cmpi slt, %8, %c0_i32_5 : i32
    %16 = vector.broadcast %15 : i1 to vector<8x128xi1>
    %17 = vector.broadcast %16 : vector<8x128xi1> to vector<8x128xi1>
    %18 = arith.xori %14, %17 : vector<8x128xi1>
    %19 = arith.andi %18, %12 : vector<8x128xi1>
    %20 = vector.broadcast %8 : i32 to vector<8x128xi32>
    %21 = arith.addi %10, %20 : vector<8x128xi32>
    %22 = arith.select %19, %21, %10 : vector<8x128xi1>, vector<8x128xi32>
    %c0_6 = arith.constant 0 : index
    %c0_7 = arith.constant 0 : index
    %23 = vector.load %arg2[%c0_6, %c0_7] : memref<8x24xf32, #tpu.memory_space<vmem>>, vector<8x24xf32>
    %c1_i32_8 = arith.constant 1 : i32
    %24 = tpu.dynamic_rotate %5 by %c1_i32_8 dim 1 : vector<8x128xf32>, i32 -> vector<8x128xf32>
    %c-1_i32 = arith.constant -1 : i32
    %25 = vector.broadcast %c-1_i32 : i32 to vector<8x128xi32>
    %26 = arith.addi %22, %25 : vector<8x128xi32>
    %c0_i32_9 = arith.constant 0 : i32
    %27 = vector.broadcast %c0_i32_9 : i32 to vector<8x128xi32>
    %28 = arith.cmpi sge, %26, %27 : vector<8x128xi32>
    %c-1_i32_10 = arith.constant -1 : i32
    %29 = vector.broadcast %c-1_i32_10 : i32 to vector<8x128xi32>
    %30 = arith.addi %22, %29 : vector<8x128xi32>
    %c128_i32_11 = arith.constant 128 : i32
    %31 = vector.broadcast %c128_i32_11 : i32 to vector<8x128xi32>
    %32 = arith.cmpi slt, %30, %31 : vector<8x128xi32>
    %33 = arith.andi %28, %32 : vector<8x128xi1>
    %cst = arith.constant 0.000000e+00 : f32
    %34 = vector.broadcast %cst : f32 to vector<8x128xf32>
    %35 = arith.select %33, %24, %34 : vector<8x128xi1>, vector<8x128xf32>
    %c127_i32 = arith.constant 127 : i32
    %36 = tpu.dynamic_rotate %5 by %c127_i32 dim 1 : vector<8x128xf32>, i32 -> vector<8x128xf32>
    %c1_i32_12 = arith.constant 1 : i32
    %37 = vector.broadcast %c1_i32_12 : i32 to vector<8x128xi32>
    %38 = arith.addi %22, %37 : vector<8x128xi32>
    %c0_i32_13 = arith.constant 0 : i32
    %39 = vector.broadcast %c0_i32_13 : i32 to vector<8x128xi32>
    %40 = arith.cmpi sge, %38, %39 : vector<8x128xi32>
    %c1_i32_14 = arith.constant 1 : i32
    %41 = vector.broadcast %c1_i32_14 : i32 to vector<8x128xi32>
    %42 = arith.addi %22, %41 : vector<8x128xi32>
    %c128_i32_15 = arith.constant 128 : i32
    %43 = vector.broadcast %c128_i32_15 : i32 to vector<8x128xi32>
    %44 = arith.cmpi slt, %42, %43 : vector<8x128xi32>
    %45 = arith.andi %40, %44 : vector<8x128xi1>
    %cst_16 = arith.constant 0.000000e+00 : f32
    %46 = vector.broadcast %cst_16 : f32 to vector<8x128xf32>
    %47 = arith.select %45, %36, %46 : vector<8x128xi1>, vector<8x128xf32>
    %48 = tpu.concatenate %35, %5, %47 in 0 : vector<8x128xf32>, vector<8x128xf32>, vector<8x128xf32> -> vector<24x128xf32>
    %cst_17 = arith.constant dense<0.000000e+00> : vector<8x128xf32>
    %49 = tpu.matmul %23, %48, %cst_17 {dimension_numbers = #tpu.dot_dimension_numbers<[1], [0], [0], [1], [0, 0, 1, 1], [], []>} : vector<8x24xf32>, vector<24x128xf32>, vector<8x128xf32> -> vector<8x128xf32>
    %50 = vector.broadcast %1 : vector<8x1xf32> to vector<8x128xf32>
    %51 = arith.addf %49, %50 : vector<8x128xf32>
    %cst_18 = arith.constant 0.000000e+00 : f32
    %52 = vector.broadcast %cst_18 : f32 to vector<8x128xf32>
    %53 = arith.cmpf oge, %51, %52 : vector<8x128xf32>
    %54 = vector.broadcast %2 : vector<8x1xf32> to vector<8x128xf32>
    %55 = arith.mulf %54, %51 : vector<8x128xf32>
    %56 = arith.select %53, %51, %55 : vector<8x128xi1>, vector<8x128xf32>
    %c0_19 = arith.constant 0 : index
    %c0_20 = arith.constant 0 : index
    %57 = vector.load %arg3[%c0_19, %c0_20] : memref<8x24xf32, #tpu.memory_space<vmem>>, vector<8x24xf32>
    %c1_i32_21 = arith.constant 1 : i32
    %58 = tpu.dynamic_rotate %56 by %c1_i32_21 dim 1 : vector<8x128xf32>, i32 -> vector<8x128xf32>
    %c-1_i32_22 = arith.constant -1 : i32
    %59 = vector.broadcast %c-1_i32_22 : i32 to vector<8x128xi32>
    %60 = arith.addi %22, %59 : vector<8x128xi32>
    %c0_i32_23 = arith.constant 0 : i32
    %61 = vector.broadcast %c0_i32_23 : i32 to vector<8x128xi32>
    %62 = arith.cmpi sge, %60, %61 : vector<8x128xi32>
    %c-1_i32_24 = arith.constant -1 : i32
    %63 = vector.broadcast %c-1_i32_24 : i32 to vector<8x128xi32>
    %64 = arith.addi %22, %63 : vector<8x128xi32>
    %c128_i32_25 = arith.constant 128 : i32
    %65 = vector.broadcast %c128_i32_25 : i32 to vector<8x128xi32>
    %66 = arith.cmpi slt, %64, %65 : vector<8x128xi32>
    %67 = arith.andi %62, %66 : vector<8x128xi1>
    %cst_26 = arith.constant 0.000000e+00 : f32
    %68 = vector.broadcast %cst_26 : f32 to vector<8x128xf32>
    %69 = arith.select %67, %58, %68 : vector<8x128xi1>, vector<8x128xf32>
    %c127_i32_27 = arith.constant 127 : i32
    %70 = tpu.dynamic_rotate %56 by %c127_i32_27 dim 1 : vector<8x128xf32>, i32 -> vector<8x128xf32>
    %c1_i32_28 = arith.constant 1 : i32
    %71 = vector.broadcast %c1_i32_28 : i32 to vector<8x128xi32>
    %72 = arith.addi %22, %71 : vector<8x128xi32>
    %c0_i32_29 = arith.constant 0 : i32
    %73 = vector.broadcast %c0_i32_29 : i32 to vector<8x128xi32>
    %74 = arith.cmpi sge, %72, %73 : vector<8x128xi32>
    %c1_i32_30 = arith.constant 1 : i32
    %75 = vector.broadcast %c1_i32_30 : i32 to vector<8x128xi32>
    %76 = arith.addi %22, %75 : vector<8x128xi32>
    %c128_i32_31 = arith.constant 128 : i32
    %77 = vector.broadcast %c128_i32_31 : i32 to vector<8x128xi32>
    %78 = arith.cmpi slt, %76, %77 : vector<8x128xi32>
    %79 = arith.andi %74, %78 : vector<8x128xi1>
    %cst_32 = arith.constant 0.000000e+00 : f32
    %80 = vector.broadcast %cst_32 : f32 to vector<8x128xf32>
    %81 = arith.select %79, %70, %80 : vector<8x128xi1>, vector<8x128xf32>
    %82 = tpu.concatenate %69, %56, %81 in 0 : vector<8x128xf32>, vector<8x128xf32>, vector<8x128xf32> -> vector<24x128xf32>
    %cst_33 = arith.constant dense<0.000000e+00> : vector<8x128xf32>
    %83 = tpu.matmul %57, %82, %cst_33 {dimension_numbers = #tpu.dot_dimension_numbers<[1], [0], [0], [1], [0, 0, 1, 1], [], []>} : vector<8x24xf32>, vector<24x128xf32>, vector<8x128xf32> -> vector<8x128xf32>
    %84 = vector.broadcast %3 : vector<8x1xf32> to vector<8x128xf32>
    %85 = arith.addf %83, %84 : vector<8x128xf32>
    %c0_34 = arith.constant 0 : index
    %c0_35 = arith.constant 0 : index
    %86 = vector.load %arg4[%c0_34, %c0_35] : memref<8x8xf32, #tpu.memory_space<vmem>>, vector<8x8xf32>
    %cst_36 = arith.constant dense<0.000000e+00> : vector<8x128xf32>
    %87 = tpu.matmul %86, %5, %cst_36 {dimension_numbers = #tpu.dot_dimension_numbers<[1], [0], [0], [1], [0, 0, 1, 1], [], []>} : vector<8x8xf32>, vector<8x128xf32>, vector<8x128xf32> -> vector<8x128xf32>
    %88 = vector.broadcast %4 : vector<8x1xf32> to vector<8x128xf32>
    %89 = arith.addf %87, %88 : vector<8x128xf32>
    %90 = arith.addf %85, %89 : vector<8x128xf32>
    %cst_37 = arith.constant 0.000000e+00 : f32
    %91 = vector.broadcast %cst_37 : f32 to vector<8x128xf32>
    %92 = arith.cmpf oge, %90, %91 : vector<8x128xf32>
    %cst_38 = arith.constant 0.00999999977 : f32
    %93 = vector.broadcast %cst_38 : f32 to vector<8x128xf32>
    %94 = arith.mulf %93, %90 : vector<8x128xf32>
    %95 = arith.select %92, %90, %94 : vector<8x128xi1>, vector<8x128xf32>
    %c0_39 = arith.constant 0 : index
    %c0_40 = arith.constant 0 : index
    %96 = vector.load %arg6[%c0_39, %c0_40] : memref<8x128xf32, #tpu.memory_space<vmem>>, vector<8x128xf32>
    tpu.vector_store %arg6[%c0_39, %c0_40], %95 {strides = array<i32>} : memref<8x128xf32, #tpu.memory_space<vmem>>, vector<8x128xf32>,
    return
  }
  func.func @transform_0(%arg0: i32) -> (i32, i32) {
    %c0_i32 = arith.constant 0 : i32
    %c0_i32_0 = arith.constant 0 : i32
    return %c0_i32, %arg0 : i32, i32
  }
  func.func @transform_1(%arg0: i32) -> (i32, i32) {
    %c0_i32 = arith.constant 0 : i32
    %c0_i32_0 = arith.constant 0 : i32
    %c0_i32_1 = arith.constant 0 : i32
    return %c0_i32, %c0_i32_0 : i32, i32
  }
  func.func @transform_2(%arg0: i32) -> (i32, i32) {
    %c0_i32 = arith.constant 0 : i32
    %c0_i32_0 = arith.constant 0 : i32
    %c0_i32_1 = arith.constant 0 : i32
    return %c0_i32, %c0_i32_0 : i32, i32
  }
  func.func @transform_3(%arg0: i32) -> (i32, i32) {
    %c0_i32 = arith.constant 0 : i32
    %c0_i32_0 = arith.constant 0 : i32
    %c0_i32_1 = arith.constant 0 : i32
    return %c0_i32, %c0_i32_0 : i32, i32
  }
  func.func @transform_4(%arg0: i32) -> (i32, i32) {
    %c0_i32 = arith.constant 0 : i32
    %c0_i32_0 = arith.constant 0 : i32
    %c0_i32_1 = arith.constant 0 : i32
    return %c0_i32, %c0_i32_0 : i32, i32
  }
  func.func @transform_5(%arg0: i32) -> (i32, i32) {
    %c0_i32 = arith.constant 0 : i32
    %c0_i32_0 = arith.constant 0 : i32
    return %c0_i32, %arg0 : i32, i32
  }
}

</mosaic_0001>

<llo_original>
// kernel: tpu_custom_call.1
$region0: #{tpu_custom_call.1}
  #allocation0 [shape = 'u32[]', space=smem, size = 0x4, offset = 0x4, fixed_abs, tag = 'smem constant byte address 0x4 - core index']
  #allocation1 [shape = 'u32[144,128]{1,0:T(1,128)}', space=vmem, size = 0x12000, scoped, tag = 'internal scratch']
  %s0 = inlined_call_operand.hbm [shape: f32[8,256], index: 0, kind: input, shape index: {}]
  %s1 = inlined_call_operand.hbm [shape: f32[8,24], index: 1, kind: input, shape index: {}]
  %s2 = inlined_call_operand.hbm [shape: f32[8,24], index: 2, kind: input, shape index: {}]
  %s3 = inlined_call_operand.vmem [shape: f32[8,8], index: 3, kind: input, shape index: {}]
  %s4 = inlined_call_operand.hbm [shape: f32[8,8], index: 4, kind: input, shape index: {}]
  %s5 = inlined_call_operand.hbm [shape: f32[8,256], index: 5, kind: output, shape index: {}]
  %s6 = sld [smem:[#allocation0]]
  $region69: #{tpu_custom_call.1} parent=0
    _
  %s8 = ssub.s32 1, %s6
  %s9 = scalar_select 0, %s8, %s6
  $region1: #{tpu_custom_call.1} parent=0
    #allocation2 [shape = 'u8[8192]{0}', space=vmem, size = 0x2000, scoped, tag = 'input window, operand 0']
    #allocation3 [shape = 's32[2]{0}', space=sflag, size = 0x8, scoped, tag = 'scoped memory for tpu_custom_call.1']
    #allocation4 [shape = 's32[2]{0}', space=sflag, size = 0x8, scoped, tag = 'scoped memory for tpu_custom_call.1']
    #allocation5 [shape = 'u8[4096]{0}', space=vmem, size = 0x1000, scoped, tag = 'input window, operand 1, single buffered']
    #allocation6 [shape = 's32[1]{0}', space=sflag, size = 0x4, scoped, tag = 'scoped memory for tpu_custom_call.1']
    #allocation7 [shape = 'u8[4096]{0}', space=vmem, size = 0x1000, scoped, tag = 'input window, operand 2, single buffered']
    #allocation8 [shape = 'u8[4096]{0}', space=vmem, size = 0x1000, scoped, tag = 'input window, operand 4, single buffered']
    #allocation9 [shape = 's32[1]{0}', space=sflag, size = 0x4, scoped, tag = 'scoped memory for tpu_custom_call.1']
    #allocation10 [shape = 'u8[8192]{0}', space=vmem, size = 0x2000, scoped, tag = 'output window, operand 0']
    %10 = vsyncpa [#allocation3], 0
    %s11 = scalar_lea.sflag [#allocation3], 1
    %12 = vsyncpa %s11, 0
    %13 = vsyncpa [#allocation6], 0
    %14 = vsyncpa [#allocation9], 0
    %15 = vsyncpa [#allocation4], 0
    %s16 = scalar_lea.sflag [#allocation4], 1
    %17 = vsyncpa %s16, 0
    loop: start=0, step=1, limit=4
    $region2: #{tpu_custom_call.1} parent=1 // loop_pre_header
      _
    $region3: #{tpu_custom_call.1} parent=1 // loop_header
      %s19 = sphi 0, %s23
      %p20 = scmp.ge.s32.totalorder %s19, 4
      %s29 = sphi 0, %s31
      %s32 = sphi 0, %s29
      %s33 = sphi 0, %s32
      %s49 = sphi 0, %s33
      %s53 = sphi 0, %s53
      %s55 = sphi 0, %s53
      %s56 = sphi 0, %s55
      %s70 = sphi 0, %s56
      %s74 = sphi 0, %s74
      %s76 = sphi 0, %s74
      %s77 = sphi 0, %s76
      %s91 = sphi 0, %s77
      %s95 = sphi 0, %s95
      %s97 = sphi 0, %s95
      %s98 = sphi 0, %s97
      %s112 = sphi 0, %s98
      %s116 = sphi 0, %s116
      %s118 = sphi 0, %s116
      %s119 = sphi 0, %s118
      %s133 = sphi 0, %s119
      %s139 = sphi 0, %s141
      %s142 = sphi 0, %s139
      %s143 = sphi 0, %s142
      %s159 = sphi 0, %s143
    $region4: #{tpu_custom_call.1} parent=1 // loop_header_branch
      %22 = sbr.rel (%p20) target = $region8
    $region5: #{tpu_custom_call.1} parent=1 // loop_body
      %s24 = ssub.s32 %s19, 1
      %s25 = ssub.s32 %s19, 2
      %s26 = sadd.s32 %s19, 1
      %s27 = ssub.s32 %s19, %s26
      %p28 = scmp.eq.s32.totalorder %s27, 0
      %s30 = sadd.s32 %s29, 1
      %s31 = scalar_select %p28, %s29, %s30
      %p34 = pneg %p28
      %p35 = scmp.eq.s32.totalorder %s19, 1
      %p36 = por %p34, %p35
      %p37 = scmp.ne.s32.totalorder %s29, %s32
      %p38 = scmp.eq.s32.totalorder %s19, 0
      %p39 = por %p37, %p38
      %p40 = scmp.ne.s32.totalorder %s29, %s32
      %p41 = scmp.eq.s32.totalorder %s24, 1
      %p42 = por %p40, %p41
      %p43 = scmp.ne.s32.totalorder %s32, %s33
      %p44 = scmp.eq.s32.totalorder %s24, 0
      %p45 = por %p43, %p44
      %p46 = scmp.ne.s32.totalorder %s32, %s33
      %p47 = scmp.eq.s32.totalorder %s25, 1
      %p48 = por %p46, %p47
      %p50 = scmp.ne.s32.totalorder %s33, %s49
      %p51 = scmp.eq.s32.totalorder %s25, 0
      %p52 = por %p50, %p51
      %s54 = sadd.s32 %s53, 1
      %p57 = scmp.eq.s32.totalorder %s19, 1
      %p58 = scmp.ne.s32.totalorder %s53, %s55
      %p59 = scmp.eq.s32.totalorder %s19, 0
      %p60 = por %p58, %p59
      %p61 = scmp.ne.s32.totalorder %s53, %s55
      %p62 = scmp.eq.s32.totalorder %s24, 1
      %p63 = por %p61, %p62
      %p64 = scmp.ne.s32.totalorder %s55, %s56
      %p65 = scmp.eq.s32.totalorder %s24, 0
      %p66 = por %p64, %p65
      %p67 = scmp.ne.s32.totalorder %s55, %s56
      %p68 = scmp.eq.s32.totalorder %s25, 1
      %p69 = por %p67, %p68
      %p71 = scmp.ne.s32.totalorder %s56, %s70
      %p72 = scmp.eq.s32.totalorder %s25, 0
      %p73 = por %p71, %p72
      %s75 = sadd.s32 %s74, 1
      %p78 = scmp.eq.s32.totalorder %s19, 1
      %p79 = scmp.ne.s32.totalorder %s74, %s76
      %p80 = scmp.eq.s32.totalorder %s19, 0
      %p81 = por %p79, %p80
      %p82 = scmp.ne.s32.totalorder %s74, %s76
      %p83 = scmp.eq.s32.totalorder %s24, 1
      %p84 = por %p82, %p83
      %p85 = scmp.ne.s32.totalorder %s76, %s77
      %p86 = scmp.eq.s32.totalorder %s24, 0
      %p87 = por %p85, %p86
      %p88 = scmp.ne.s32.totalorder %s76, %s77
      %p89 = scmp.eq.s32.totalorder %s25, 1
      %p90 = por %p88, %p89
      %p92 = scmp.ne.s32.totalorder %s77, %s91
      %p93 = scmp.eq.s32.totalorder %s25, 0
      %p94 = por %p92, %p93
      %s96 = sadd.s32 %s95, 1
      %p99 = scmp.eq.s32.totalorder %s19, 1
      %p100 = scmp.ne.s32.totalorder %s95, %s97
      %p101 = scmp.eq.s32.totalorder %s19, 0
      %p102 = por %p100, %p101
      %p103 = scmp.ne.s32.totalorder %s95, %s97
      %p104 = scmp.eq.s32.totalorder %s24, 1
      %p105 = por %p103, %p104
      %p106 = scmp.ne.s32.totalorder %s97, %s98
      %p107 = scmp.eq.s32.totalorder %s24, 0
      %p108 = por %p106, %p107
      %p109 = scmp.ne.s32.totalorder %s97, %s98
      %p110 = scmp.eq.s32.totalorder %s25, 1
      %p111 = por %p109, %p110
      %p113 = scmp.ne.s32.totalorder %s98, %s112
      %p114 = scmp.eq.s32.totalorder %s25, 0
      %p115 = por %p113, %p114
      %s117 = sadd.s32 %s116, 1
      %p120 = scmp.eq.s32.totalorder %s19, 1
      %p121 = scmp.ne.s32.totalorder %s116, %s118
      %p122 = scmp.eq.s32.totalorder %s19, 0
      %p123 = por %p121, %p122
      %p124 = scmp.ne.s32.totalorder %s116, %s118
      %p125 = scmp.eq.s32.totalorder %s24, 1
      %p126 = por %p124, %p125
      %p127 = scmp.ne.s32.totalorder %s118, %s119
      %p128 = scmp.eq.s32.totalorder %s24, 0
      %p129 = por %p127, %p128
      %p130 = scmp.ne.s32.totalorder %s118, %s119
      %p131 = scmp.eq.s32.totalorder %s25, 1
      %p132 = por %p130, %p131
      %p134 = scmp.ne.s32.totalorder %s119, %s133
      %p135 = scmp.eq.s32.totalorder %s25, 0
      %p136 = por %p134, %p135
      %s137 = ssub.s32 %s19, %s26
      %p138 = scmp.eq.s32.totalorder %s137, 0
      %s140 = sadd.s32 %s139, 1
      %s141 = scalar_select %p138, %s139, %s140
      %p144 = pneg %p138
      %p145 = scmp.eq.s32.totalorder %s19, 1
      %p146 = por %p144, %p145
      %p147 = scmp.ne.s32.totalorder %s139, %s142
      %p148 = scmp.eq.s32.totalorder %s19, 0
      %p149 = por %p147, %p148
      %p150 = scmp.ne.s32.totalorder %s139, %s142
      %p151 = scmp.eq.s32.totalorder %s24, 1
      %p152 = por %p150, %p151
      %p153 = scmp.ne.s32.totalorder %s142, %s143
      %p154 = scmp.eq.s32.totalorder %s24, 0
      %p155 = por %p153, %p154
      %p156 = scmp.ne.s32.totalorder %s142, %s143
      %p157 = scmp.eq.s32.totalorder %s25, 1
      %p158 = por %p156, %p157
      %p160 = scmp.ne.s32.totalorder %s143, %s159
      %p161 = scmp.eq.s32.totalorder %s25, 0
      %p162 = por %p160, %p161
      %p163 = scmp.le.s32.totalorder 1, %s19
      %p164 = scmp.lt.s32.totalorder %s19, 3
      %p165 = pnand %p163, %p164
      %p166 = pneg %p165
      // Predicated region
      $region9: #{tpu_custom_call.1} parent=5 // pred_check
        _
      $region10: #{tpu_custom_call.1} parent=5 // pred_check_branch
        %168 = sbr.rel (%p165) target = $region12
      $region11: #{tpu_custom_call.1} parent=5 // pred_region
        %s169 = ssub.s32 %s19, 1
        // Predicated region
        $region13: #{tpu_custom_call.1} parent=11 // pred_check
          %p170 = pneg %p66
        $region14: #{tpu_custom_call.1} parent=11 // pred_check_branch
          %172 = sbr.rel (%p170) target = $region16
        $region15: #{tpu_custom_call.1} parent=11 // pred_region
          %s174 = ssub.s32 128, 128
          %175 = vsyncadd [#allocation6], %s174
          %s177 = sshll.u32 [#allocation5], 4
          %s178 = int_to_ptr.vmem [resolvable:$true] %s177
          %180 = dma.hbm_to_vmem [thread:$0]  %s1, 128, %s178, [#allocation6]
        $region16: #{tpu_custom_call.1} parent=11 // pred_fallthru
          _
        // Predicated region
        $region17: #{tpu_custom_call.1} parent=11 // pred_check
          %p181 = pneg %p87
        $region18: #{tpu_custom_call.1} parent=11 // pred_check_branch
          %183 = sbr.rel (%p181) target = $region20
        $region19: #{tpu_custom_call.1} parent=11 // pred_region
          %s185 = ssub.s32 128, 128
          %186 = vsyncadd [#allocation6], %s185
          %s188 = sshll.u32 [#allocation7], 4
          %s189 = int_to_ptr.vmem [resolvable:$true] %s188
          %191 = dma.hbm_to_vmem [thread:$0]  %s2, 128, %s189, [#allocation6]
        $region20: #{tpu_custom_call.1} parent=11 // pred_fallthru
          _
        // Predicated region
        $region21: #{tpu_custom_call.1} parent=11 // pred_check
          %p192 = pneg %p108
        $region22: #{tpu_custom_call.1} parent=11 // pred_check_branch
          %194 = sbr.rel (%p192) target = $region24
        $region23: #{tpu_custom_call.1} parent=11 // pred_region
          _
        $region24: #{tpu_custom_call.1} parent=11 // pred_fallthru
          _
        // Predicated region
        $region25: #{tpu_custom_call.1} parent=11 // pred_check
          %p195 = pneg %p129
        $region26: #{tpu_custom_call.1} parent=11 // pred_check_branch
          %197 = sbr.rel (%p195) target = $region28
        $region27: #{tpu_custom_call.1} parent=11 // pred_region
          %s199 = ssub.s32 128, 128
          %200 = vsyncadd [#allocation9], %s199
          %s202 = sshll.u32 [#allocation8], 4
          %s203 = int_to_ptr.vmem [resolvable:$true] %s202
          %205 = dma.hbm_to_vmem [thread:$0]  %s4, 128, %s203, [#allocation9]
        $region28: #{tpu_custom_call.1} parent=11 // pred_fallthru
          _
      $region12: #{tpu_custom_call.1} parent=5 // pred_fallthru
        _
      %p206 = scmp.lt.s32.totalorder %s19, 2
      // Predicated region
      $region29: #{tpu_custom_call.1} parent=5 // pred_check
        %p207 = pneg %p206
      $region30: #{tpu_custom_call.1} parent=5 // pred_check_branch
        %209 = sbr.rel (%p207) target = $region32
      $region31: #{tpu_custom_call.1} parent=5 // pred_region
        // Predicated region
        $region33: #{tpu_custom_call.1} parent=31 // pred_check
          %p210 = pneg %p39
        $region34: #{tpu_custom_call.1} parent=31 // pred_check_branch
          %212 = sbr.rel (%p210) target = $region36
        $region35: #{tpu_custom_call.1} parent=31 // pred_region
          %s213 = sand.u32 %s29, 1
          %s214 = scalar_lea.sflag [#allocation3], %s213
          %s215 = sand.u32 %s29, 1
          %s216 = smul.addr %s215, 8
          %s217 = scalar_lea.vmem [#allocation2], %s216
          %s219 = ssub.s32 128, 128
          %220 = vsyncadd %s214, %s219
          %s221 = smul.addr %s19, 128
          %s222 = scalar_lea.hbm %s0, %s221
          %s224 = sshll.u32 %s217, 4
          %s225 = int_to_ptr.vmem [resolvable:$true] %s224
          %227 = dma.hbm_to_vmem [thread:$0]  %s222, 128, %s225, %s214
        $region36: #{tpu_custom_call.1} parent=31 // pred_fallthru
          _
      $region32: #{tpu_custom_call.1} parent=5 // pred_fallthru
        _
      %p228 = scmp.le.s32.totalorder 1, %s19
      %p229 = scmp.lt.s32.totalorder %s19, 3
      %p230 = pnand %p228, %p229
      %p231 = pneg %p230
      // Predicated region
      $region37: #{tpu_custom_call.1} parent=5 // pred_check
        _
      $region38: #{tpu_custom_call.1} parent=5 // pred_check_branch
        %233 = sbr.rel (%p230) target = $region40
      $region39: #{tpu_custom_call.1} parent=5 // pred_region
        %s234 = ssub.s32 %s19, 1
        %s235 = sand.u32 %s32, 1
        %s236 = scalar_lea.sflag [#allocation3], %s235
        %s237 = sand.u32 %s32, 1
        %s238 = smul.addr %s237, 8
        %s239 = scalar_lea.vmem [#allocation2], %s238
        // Predicated region
        $region41: #{tpu_custom_call.1} parent=39 // pred_check
          %p240 = pneg %p45
        $region42: #{tpu_custom_call.1} parent=39 // pred_check_branch
          %242 = sbr.rel (%p240) target = $region44
        $region43: #{tpu_custom_call.1} parent=39 // pred_region
          %243 = dma.done %s236, 128
        $region44: #{tpu_custom_call.1} parent=39 // pred_fallthru
          _
        // Predicated region
        $region45: #{tpu_custom_call.1} parent=39 // pred_check
          %p244 = pneg %p66
        $region46: #{tpu_custom_call.1} parent=39 // pred_check_branch
          %246 = sbr.rel (%p244) target = $region48
        $region47: #{tpu_custom_call.1} parent=39 // pred_region
          %247 = dma.done [#allocation6], 128
        $region48: #{tpu_custom_call.1} parent=39 // pred_fallthru
          _
        // Predicated region
        $region49: #{tpu_custom_call.1} parent=39 // pred_check
          %p248 = pneg %p87
        $region50: #{tpu_custom_call.1} parent=39 // pred_check_branch
          %250 = sbr.rel (%p248) target = $region52
        $region51: #{tpu_custom_call.1} parent=39 // pred_region
          %251 = dma.done [#allocation6], 128
        $region52: #{tpu_custom_call.1} parent=39 // pred_fallthru
          _
        // Predicated region
        $region53: #{tpu_custom_call.1} parent=39 // pred_check
          %p252 = pneg %p129
        $region54: #{tpu_custom_call.1} parent=39 // pred_check_branch
          %254 = sbr.rel (%p252) target = $region56
        $region55: #{tpu_custom_call.1} parent=39 // pred_region
          %255 = dma.done [#allocation9], 128
        $region56: #{tpu_custom_call.1} parent=39 // pred_fallthru
          _
        %s256 = sand.u32 %s32, 1
        %s257 = scalar_lea.sflag [#allocation3], %s256
        %s258 = sand.u32 %s32, 1
        %s259 = smul.addr %s258, 8
        %s260 = scalar_lea.vmem [#allocation2], %s259
        %p261 = pneg %p45
        %p262 = pneg %p42
        %p263 = pneg %p66
        %p264 = pneg %p63
        %p265 = pneg %p87
        %p266 = pneg %p84
        %p267 = pneg %p108
        %p268 = pneg %p105
        %p269 = pneg %p129
        %p270 = pneg %p126
        %p271 = pneg %p155
        %p272 = pneg %p152
        %s273 = sand.u32 %s142, 1
        %s274 = scalar_lea.sflag [#allocation4], %s273
        %s275 = sand.u32 %s142, 1
        %s276 = smul.addr %s275, 8
        %s277 = scalar_lea.vmem [#allocation10], %s276
        %v278 = vld [vmem:[#allocation8] sm:$0xff]
        %v279 = vld [vmem:[%s239] sm:$0xff]
        %v280 = vlaneseq
        %v281 = vand.u32 %v280, 127
        %vm282 = vcmp.lt.s32.totalorder %v281, 0
        %v283 = vsub.s32 0, %v281
        %v284 = vsel %vm282, %v283, %v281
        %v285 = vshrl.u32 %v284, 7
        %v286 = vand.u32 %v284, 127
        %v287 = vsub.s32 0, %v286
        %v288 = vsel %vm282, %v287, %v286
        %vm289 = vcmp.ne.s32.totalorder %v288, 0
        %vm290 = vcmp.lt.s32.totalorder %v288, 0
        %vm291 = vmand %vm290, %vm289
        %v292 = vadd.s32 %v288, 128
        %v293 = vsel %vm291, %v292, %v288
        %v294 = vld [vmem:[#allocation5] sm:$0xff]
        %295 = vrot.lane.b32.xlu0 %v279, 1
        %v296 = vpop.permute.xlu0 %295
        %v297 = vadd.s32 %v293, 4294967295
        %vm298 = vcmp.ge.s32.totalorder %v297, 0
        %vm299 = vcmp.lt.s32.totalorder %v297, 128
        %vm300 = vmand %vm298, %vm299
        %v301 = vsel %vm300, %v296, 0.0
        %302 = vrot.lane.b32.xlu0 %v279, 127
        %v303 = vpop.permute.xlu0 %302
        %v304 = vadd.s32 %v293, 1
        %vm305 = vcmp.ge.s32.totalorder %v304, 0
        %vm306 = vcmp.lt.s32.totalorder %v304, 128
        %vm307 = vmand %vm305, %vm306
        %v308 = vsel %vm307, %v303, 0.0
        %310 = vset.pattern.permute.xlu0 0
        %311 = vperm.xlu0 %310, %v278
        %v312 = vpop.permute.xlu0 %311
        %vm314 = vcmask 195584
        %v316 = vsel %vm314, %v294, 0
        %318 = vmatprep.subr.mxu0 0.0
        %319 = vmatpush1.msra.mxu0 %v301
        %320 = vmatprep.subr.mxu0 0.0
        %321 = vmatpush1.msra.mxu0 %v279
        %322 = vmatprep.subr.mxu0 0.0
        %323 = vmatpush1.msra.mxu0 %v308
        %324 = vmatprep.subr.mxu0 0.0
        %325 = vmatpush1.msra.mxu0 0.0
        %326 = vmatprep.subr.mxu0 0.0
        %327 = vmatpush1.msra.mxu0 0.0
        %328 = vmatprep.subr.mxu0 0.0
        %329 = vmatpush1.msra.mxu0 0.0
        %330 = vmatprep.subr.mxu0 0.0
        %331 = vmatpush1.msra.mxu0 0.0
        %332 = vmatprep.subr.mxu0 0.0
        %333 = vmatpush1.msra.mxu0 0.0
        %334 = vmatprep.subr.mxu0 0.0
        %335 = vmatpush1.msra.mxu0 0.0
        %336 = vmatprep.subr.mxu0 0.0
        %337 = vmatpush1.msra.mxu0 0.0
        %338 = vmatprep.subr.mxu0 0.0
        %339 = vmatpush1.msra.mxu0 0.0
        %340 = vmatprep.subr.mxu0 0.0
        %341 = vmatpush1.msra.mxu0 0.0
        %342 = vmatprep.subr.mxu0 0.0
        %343 = vmatpush1.msra.mxu0 0.0
        %344 = vmatprep.subr.mxu0 0.0
        %345 = vmatpush1.msra.mxu0 0.0
        %346 = vmatprep.subr.mxu0 0.0
        %347 = vmatpush1.msra.mxu0 0.0
        %348 = vmatprep.subr.mxu0 0.0
        %349 = vmatpush1.msra.mxu0 0.0
        %350 = vmatprep.subr.mxu0 0.0
        %351 = vmatpush1.msra.mxu0 0.0
        %352 = vmatprep.subr.mxu0 0.0
        %353 = vmatpush1.msra.mxu0 0.0
        %354 = vmatprep.subr.mxu0 0.0
        %355 = vmatpush1.msra.mxu0 0.0
        %356 = vmatprep.subr.mxu0 0.0
        %357 = vmatpush1.msra.mxu0 0.0
        %358 = vmatprep.subr.mxu0 0.0
        %359 = vmatpush1.msra.mxu0 0.0
        %360 = vmatprep.subr.mxu0 0.0
        %361 = vmatpush1.msra.mxu0 0.0
        %362 = vmatprep.subr.mxu0 0.0
        %363 = vmatpush1.msra.mxu0 0.0
        %364 = vmatprep.subr.mxu0 0.0
        %365 = vmatpush1.msra.mxu0 0.0
        %366 = vmatprep.subr.mxu0 0.0
        %367 = vmatpush1.msra.mxu0 0.0
        %368 = vmatprep.subr.mxu0 0.0
        %369 = vmatpush1.msra.mxu0 0.0
        %370 = vmatprep.subr.mxu0 0.0
        %371 = vmatpush1.msra.mxu0 0.0
        %372 = vmatprep.subr.mxu0 0.0
        %373 = vmatpush1.msra.mxu0 0.0
        %374 = vmatprep.subr.mxu0 0.0
        %375 = vmatpush1.msra.mxu0 0.0
        %376 = vmatprep.subr.mxu0 0.0
        %377 = vmatpush1.msra.mxu0 0.0
        %378 = vmatprep.subr.mxu0 0.0
        %379 = vmatpush1.msra.mxu0 0.0
        %380 = vmatprep.subr.mxu0 0.0
        %381 = vmatpush1.msra.mxu0 0.0
        %382 = vmatprep.mubr.f32.mxu0 0.0
        %383 = vmatmul.mubr.f32.gmra.mrb[0].mxu0 %v316
        %v384 = vpop.f32.mrb[0].mxu0
        %v385 = vadd.f32 %v312, %v384
        %v386 = vpop.f32.mrb[0].mxu0
        %387 = vdwg.mxu0
        %vm388 = vcmp.ge.f32.partialorder %v385, 0.0
        %389 = vset.pattern.permute.xlu0 1
        %390 = vperm.xlu0 %389, %v278
        %v391 = vpop.permute.xlu0 %390
        %v393 = vmul.f32 %v391, %v385
        %v394 = vsel %vm388, %v385, %v393
        %v395 = vld [vmem:[#allocation7] sm:$0xff]
        %396 = vrot.lane.b32.xlu0 %v394, 1
        %v397 = vpop.permute.xlu0 %396
        %v398 = vsel %vm300, %v397, 0.0
        %399 = vrot.lane.b32.xlu0 %v394, 127
        %v400 = vpop.permute.xlu0 %399
        %v401 = vsel %vm307, %v400, 0.0
        %402 = vset.pattern.permute.xlu0 2
        %403 = vperm.xlu0 %402, %v278
        %v404 = vpop.permute.xlu0 %403
        %v407 = vsel %vm314, %v395, 0
        %409 = vmatprep.subr.mxu0 0.0
        %410 = vmatpush1.msra.mxu0 %v398
        %411 = vmatprep.subr.mxu0 0.0
        %412 = vmatpush1.msra.mxu0 %v394
        %413 = vmatprep.subr.mxu0 0.0
        %414 = vmatpush1.msra.mxu0 %v401
        %415 = vmatprep.subr.mxu0 0.0
        %416 = vmatpush1.msra.mxu0 0.0
        %417 = vmatprep.subr.mxu0 0.0
        %418 = vmatpush1.msra.mxu0 0.0
        %419 = vmatprep.subr.mxu0 0.0
        %420 = vmatpush1.msra.mxu0 0.0
        %421 = vmatprep.subr.mxu0 0.0
        %422 = vmatpush1.msra.mxu0 0.0
        %423 = vmatprep.subr.mxu0 0.0
        %424 = vmatpush1.msra.mxu0 0.0
        %425 = vmatprep.subr.mxu0 0.0
        %426 = vmatpush1.msra.mxu0 0.0
        %427 = vmatprep.subr.mxu0 0.0
        %428 = vmatpush1.msra.mxu0 0.0
        %429 = vmatprep.subr.mxu0 0.0
        %430 = vmatpush1.msra.mxu0 0.0
        %431 = vmatprep.subr.mxu0 0.0
        %432 = vmatpush1.msra.mxu0 0.0
        %433 = vmatprep.subr.mxu0 0.0
        %434 = vmatpush1.msra.mxu0 0.0
        %435 = vmatprep.subr.mxu0 0.0
        %436 = vmatpush1.msra.mxu0 0.0
        %437 = vmatprep.subr.mxu0 0.0
        %438 = vmatpush1.msra.mxu0 0.0
        %439 = vmatprep.subr.mxu0 0.0
        %440 = vmatpush1.msra.mxu0 0.0
        %441 = vmatprep.subr.mxu0 0.0
        %442 = vmatpush1.msra.mxu0 0.0
        %443 = vmatprep.subr.mxu0 0.0
        %444 = vmatpush1.msra.mxu0 0.0
        %445 = vmatprep.subr.mxu0 0.0
        %446 = vmatpush1.msra.mxu0 0.0
        %447 = vmatprep.subr.mxu0 0.0
        %448 = vmatpush1.msra.mxu0 0.0
        %449 = vmatprep.subr.mxu0 0.0
        %450 = vmatpush1.msra.mxu0 0.0
        %451 = vmatprep.subr.mxu0 0.0
        %452 = vmatpush1.msra.mxu0 0.0
        %453 = vmatprep.subr.mxu0 0.0
        %454 = vmatpush1.msra.mxu0 0.0
        %455 = vmatprep.subr.mxu0 0.0
        %456 = vmatpush1.msra.mxu0 0.0
        %457 = vmatprep.subr.mxu0 0.0
        %458 = vmatpush1.msra.mxu0 0.0
        %459 = vmatprep.subr.mxu0 0.0
        %460 = vmatpush1.msra.mxu0 0.0
        %461 = vmatprep.subr.mxu0 0.0
        %462 = vmatpush1.msra.mxu0 0.0
        %463 = vmatprep.subr.mxu0 0.0
        %464 = vmatpush1.msra.mxu0 0.0
        %465 = vmatprep.subr.mxu0 0.0
        %466 = vmatpush1.msra.mxu0 0.0
        %467 = vmatprep.subr.mxu0 0.0
        %468 = vmatpush1.msra.mxu0 0.0
        %469 = vmatprep.subr.mxu0 0.0
        %470 = vmatpush1.msra.mxu0 0.0
        %471 = vmatprep.subr.mxu0 0.0
        %472 = vmatpush1.msra.mxu0 0.0
        %473 = vmatprep.mubr.f32.mxu0 0.0
        %474 = vmatmul.mubr.f32.gmra.mrb[0].mxu0 %v407
        %v475 = vpop.f32.mrb[0].mxu0
        %v476 = vadd.f32 %v404, %v475
        %v477 = vpop.f32.mrb[0].mxu0
        %478 = vdwg.mxu0
        %v479 = vld [vmem:[%s3] sm:$0xff]
        %480 = vset.pattern.permute.xlu0 3
        %481 = vperm.xlu0 %480, %v278
        %v482 = vpop.permute.xlu0 %481
        %vm484 = vcmask 64512
        %v486 = vsel %vm484, %v479, 0
        %488 = vmatprep.subr.mxu0 0.0
        %489 = vmatpush1.msra.mxu0 %v279
        %490 = vmatprep.subr.mxu0 0.0
        %491 = vmatpush1.msra.mxu0 0.0
        %492 = vmatprep.subr.mxu0 0.0
        %493 = vmatpush1.msra.mxu0 0.0
        %494 = vmatprep.subr.mxu0 0.0
        %495 = vmatpush1.msra.mxu0 0.0
        %496 = vmatprep.subr.mxu0 0.0
        %497 = vmatpush1.msra.mxu0 0.0
        %498 = vmatprep.subr.mxu0 0.0
        %499 = vmatpush1.msra.mxu0 0.0
        %500 = vmatprep.subr.mxu0 0.0
        %501 = vmatpush1.msra.mxu0 0.0
        %502 = vmatprep.subr.mxu0 0.0
        %503 = vmatpush1.msra.mxu0 0.0
        %504 = vmatprep.subr.mxu0 0.0
        %505 = vmatpush1.msra.mxu0 0.0
        %506 = vmatprep.subr.mxu0 0.0
        %507 = vmatpush1.msra.mxu0 0.0
        %508 = vmatprep.subr.mxu0 0.0
        %509 = vmatpush1.msra.mxu0 0.0
        %510 = vmatprep.subr.mxu0 0.0
        %511 = vmatpush1.msra.mxu0 0.0
        %512 = vmatprep.subr.mxu0 0.0
        %513 = vmatpush1.msra.mxu0 0.0
        %514 = vmatprep.subr.mxu0 0.0
        %515 = vmatpush1.msra.mxu0 0.0
        %516 = vmatprep.subr.mxu0 0.0
        %517 = vmatpush1.msra.mxu0 0.0
        %518 = vmatprep.subr.mxu0 0.0
        %519 = vmatpush1.msra.mxu0 0.0
        %520 = vmatprep.subr.mxu0 0.0
        %521 = vmatpush1.msra.mxu0 0.0
        %522 = vmatprep.subr.mxu0 0.0
        %523 = vmatpush1.msra.mxu0 0.0
        %524 = vmatprep.subr.mxu0 0.0
        %525 = vmatpush1.msra.mxu0 0.0
        %526 = vmatprep.subr.mxu0 0.0
        %527 = vmatpush1.msra.mxu0 0.0
        %528 = vmatprep.subr.mxu0 0.0
        %529 = vmatpush1.msra.mxu0 0.0
        %530 = vmatprep.subr.mxu0 0.0
        %531 = vmatpush1.msra.mxu0 0.0
        %532 = vmatprep.subr.mxu0 0.0
        %533 = vmatpush1.msra.mxu0 0.0
        %534 = vmatprep.subr.mxu0 0.0
        %535 = vmatpush1.msra.mxu0 0.0
        %536 = vmatprep.subr.mxu0 0.0
        %537 = vmatpush1.msra.mxu0 0.0
        %538 = vmatprep.subr.mxu0 0.0
        %539 = vmatpush1.msra.mxu0 0.0
        %540 = vmatprep.subr.mxu0 0.0
        %541 = vmatpush1.msra.mxu0 0.0
        %542 = vmatprep.subr.mxu0 0.0
        %543 = vmatpush1.msra.mxu0 0.0
        %544 = vmatprep.subr.mxu0 0.0
        %545 = vmatpush1.msra.mxu0 0.0
        %546 = vmatprep.subr.mxu0 0.0
        %547 = vmatpush1.msra.mxu0 0.0
        %548 = vmatprep.subr.mxu0 0.0
        %549 = vmatpush1.msra.mxu0 0.0
        %550 = vmatprep.subr.mxu0 0.0
        %551 = vmatpush1.msra.mxu0 0.0
        %552 = vmatprep.mubr.f32.mxu0 0.0
        %553 = vmatmul.mubr.f32.gmra.mrb[0].mxu0 %v486
        %v554 = vpop.f32.mrb[0].mxu0
        %v555 = vadd.f32 %v482, %v554
        %v556 = vpop.f32.mrb[0].mxu0
        %557 = vdwg.mxu0
        %v558 = vadd.f32 %v476, %v555
        %vm559 = vcmp.ge.f32.partialorder %v558, 0.0
        %v560 = vmul.f32 %v558, 0.01
        %v561 = vsel %vm559, %v558, %v560
        %562 = vst [vmem:[%s277] sm:$0xff] %v561
        %s563 = sand.u32 %s142, 1
        %s564 = scalar_lea.sflag [#allocation4], %s563
        %s565 = sand.u32 %s142, 1
        %s566 = smul.addr %s565, 8
        %s567 = scalar_lea.vmem [#allocation10], %s566
        // Predicated region
        $region57: #{tpu_custom_call.1} parent=39 // pred_check
          %p568 = pneg %p152
        $region58: #{tpu_custom_call.1} parent=39 // pred_check_branch
          %570 = sbr.rel (%p568) target = $region60
        $region59: #{tpu_custom_call.1} parent=39 // pred_region
          %s572 = ssub.s32 128, 128
          %573 = vsyncadd %s564, %s572
          %s574 = smul.addr %s24, 128
          %s575 = scalar_lea.hbm %s5, %s574
          %s577 = sshll.u32 %s567, 4
          %s578 = int_to_ptr.vmem [resolvable:$true] %s577
          %580 = dma.vmem_to_hbm [thread:$0]  %s578, 128, %s575, %s564
        $region60: #{tpu_custom_call.1} parent=39 // pred_fallthru
          _
      $region40: #{tpu_custom_call.1} parent=5 // pred_fallthru
        _
      %p581 = scmp.le.s32.totalorder 2, %s19
      // Predicated region
      $region61: #{tpu_custom_call.1} parent=5 // pred_check
        %p582 = pneg %p581
      $region62: #{tpu_custom_call.1} parent=5 // pred_check_branch
        %584 = sbr.rel (%p582) target = $region64
      $region63: #{tpu_custom_call.1} parent=5 // pred_region
        %s585 = ssub.s32 %s19, 2
        // Predicated region
        $region65: #{tpu_custom_call.1} parent=63 // pred_check
          %p586 = pneg %p158
        $region66: #{tpu_custom_call.1} parent=63 // pred_check_branch
          %588 = sbr.rel (%p586) target = $region68
        $region67: #{tpu_custom_call.1} parent=63 // pred_region
          %s589 = sand.u32 %s143, 1
          %s590 = scalar_lea.sflag [#allocation4], %s589
          %s591 = sand.u32 %s143, 1
          %s592 = smul.addr %s591, 8
          %s593 = scalar_lea.vmem [#allocation10], %s592
          %594 = dma.done %s590, 128
        $region68: #{tpu_custom_call.1} parent=63 // pred_fallthru
          _
      $region64: #{tpu_custom_call.1} parent=5 // pred_fallthru
        _
    $region6: #{tpu_custom_call.1} parent=1 // loop_footer
      %s23 = sadd.s32 1, %s19
    $region7: #{tpu_custom_call.1} parent=1 // loop_footer_branch
      %18 = sbr.rel target = $region3
    $region8: #{tpu_custom_call.1} parent=1 // loop_exit
      _
    %595 = vsyncpa [#allocation3], 1
    %s596 = scalar_lea.sflag [#allocation3], 1
    %597 = vsyncpa %s596, 1
    %598 = vsyncpa [#allocation6], 1
    %599 = vsyncpa [#allocation9], 1
    %600 = vsyncpa [#allocation4], 1
    %s601 = scalar_lea.sflag [#allocation4], 1
    %602 = vsyncpa %s601, 1

</llo_original>
